<compile_context>
chip_gen: v5e
topology: v5e:2x2
jax: 0.10.0
libtpu: 0.0.40
codegen_flags: <defaults>
</compile_context>

<pallas_src>
import functools

import jax
import jax.numpy as jnp
from jax.experimental import pallas as pl
from jax.experimental.pallas import tpu as pltpu


def _tv_kernel(x_ref, hmask_ref, wmask_ref, acc_h_ref, acc_w_ref, *, w, hw):
    """One grid step over a (rows, H*W) slab of flattened (N*C) images.

    x_ref      : (rows, hw)  input slab (original dtype).
    hmask_ref  : (1, hw)     f32, 1.0 where the vertical  neighbor (+W) is valid.
    wmask_ref  : (1, hw)     f32, 1.0 where the horizontal neighbor (+1) is valid.
    acc_h/acc_w: (rows, hw)  f32 accumulators, resident across the whole grid.
    """

    @pl.when(pl.program_id(0) == 0)
    def _init():
        acc_h_ref[...] = jnp.zeros_like(acc_h_ref)
        acc_w_ref[...] = jnp.zeros_like(acc_w_ref)

    x = x_ref[...]                                      # (rows, hw)

    # jnp.roll convention: roll(x, hw - s) places x[p + s] at position p.
    nxt_col = pltpu.roll(x, shift=hw - 1, axis=1)       # horizontal neighbor (+1)
    nxt_row = pltpu.roll(x, shift=hw - w, axis=1)       # vertical neighbor   (+W)

    # Differences in the input dtype (bf16-friendly on v6e/v7x), then f32
    # square-accumulate; invalid (seam / wrap-around) pairs are zeroed by mask.
    dw = (nxt_col - x).astype(jnp.float32) * wmask_ref[...]
    dh = (nxt_row - x).astype(jnp.float32) * hmask_ref[...]

    acc_h_ref[...] += dh * dh
    acc_w_ref[...] += dw * dw


def tv_loss(x, tv_loss_weight: float = 1.0, *,
            vmem_budget_bytes: int = 16 * 1024 * 1024):
    """Total variation loss, semantics identical to the PyTorch TVLoss.forward."""
    n, c, h, w = x.shape
    hw = h * w
    b = n * c

    # Lane-dense layout: one flattened (H*W) image per row.
    x2 = x.reshape(b, hw)

    # Validity masks (computed once, tiny, resident in VMEM).
    col = jnp.arange(hw, dtype=jnp.int32)
    hmask = (col < (hw - w)).astype(jnp.float32).reshape(1, hw)
    wmask = ((col % w) != (w - 1)).astype(jnp.float32).reshape(1, hw)

    # Rows per grid step: double-buffered input block + (assume double-buffered)
    # two f32 accumulators must fit the conservative (v7x-safe) VMEM budget.
    in_itemsize = x.dtype.itemsize
    bytes_per_row = 2 * hw * in_itemsize + 4 * hw * 4
    rows = max(int(vmem_budget_bytes // max(bytes_per_row, 1)), 8)
    rows -= rows % 8                    # keep sublane-aligned tiling
    rows = max(rows, 8)

    if rows >= b:
        rows = b
        b_pad = b
    else:
        b_pad = int(pl.cdiv(b, rows)) * rows
    if b_pad != b:
        # Zero-padded slabs contribute exactly 0 to both sums.
        x2 = jnp.pad(x2, ((0, b_pad - b), (0, 0)))

    grid = (b_pad // rows,)

    kernel = functools.partial(_tv_kernel, w=w, hw=hw)

    acc_h, acc_w = pl.pallas_call(
        kernel,
        out_shape=(
            jax.ShapeDtypeStruct((rows, hw), jnp.float32),
            jax.ShapeDtypeStruct((rows, hw), jnp.float32),
        ),
        grid_spec=pltpu.PrefetchScalarGridSpec(
            num_scalar_prefetch=0,
            grid=grid,
            in_specs=[
                pl.BlockSpec((rows, hw), lambda i: (i, 0)),   # streaming slabs
                pl.BlockSpec((1, hw), lambda i: (0, 0)),      # hmask (resident)
                pl.BlockSpec((1, hw), lambda i: (0, 0)),      # wmask (resident)
            ],
            out_specs=[
                pl.BlockSpec((rows, hw), lambda i: (0, 0)),   # resident accumulators
                pl.BlockSpec((rows, hw), lambda i: (0, 0)),
            ],
        ),
        compiler_params=pltpu.CompilerParams(
            # Single reduction axis with resident accumulators -> arbitrary.
            dimension_semantics=("arbitrary",),
            vmem_limit_bytes=32 * 1024 * 1024,
        ),
    )(x2, hmask, wmask)

    # Deferred scalar collapse (tree-style, in plain JAX).
    h_tv = jnp.sum(acc_h)
    w_tv = jnp.sum(acc_w)

    count_h = c * (h - 1) * w
    count_w = c * h * (w - 1)

    return tv_loss_weight * 2.0 * (h_tv / count_h + w_tv / count_w) / n


def tv_loss_ref(x, tv_loss_weight: float = 1.0):
    """Pure-JAX reference (mirrors the PyTorch code)."""
    n, c, h, w = x.shape
    count_h = c * (h - 1) * w
    count_w = c * h * (w - 1)
    h_tv = jnp.sum((x[:, :, 1:, :] - x[:, :, : h - 1, :]) ** 2)
    w_tv = jnp.sum((x[:, :, :, 1:] - x[:, :, :, : w - 1]) ** 2)
    return tv_loss_weight * 2.0 * (h_tv / count_h + w_tv / count_w) / n


if __name__ == "__main__":
    key = jax.random.PRNGKey(0)
    x = jax.random.normal(key, (2, 4, 16, 16), dtype=jnp.float32)

    out = tv_loss(x, tv_loss_weight=1.0)
    out = jax.block_until_ready(out)

    ref = tv_loss_ref(x, tv_loss_weight=1.0)
    assert jnp.allclose(out, ref, rtol=1e-5, atol=1e-5), (out, ref)

    print("KERNEL_OK")
</pallas_src>

<mosaic_0001>
module attributes {stable_mosaic.version = 11 : i64} {
  func.func @_tv_kernel(%arg0: i32, %arg1: memref<8x256xf32, #tpu.memory_space<vmem>>, %arg2: memref<1x256xf32, #tpu.memory_space<vmem>>, %arg3: memref<1x256xf32, #tpu.memory_space<vmem>>, %arg4: memref<8x256xf32, #tpu.memory_space<vmem>>, %arg5: memref<8x256xf32, #tpu.memory_space<vmem>>) attributes {dimension_semantics = [#tpu.dimension_semantics<arbitrary>], iteration_bounds = array<i64: 1>, scalar_prefetch = 0 : i64, scratch_operands = 0 : i64, tpu.core_type = #tpu.core_type<tc>, window_params = [{transform_indices = @transform_0, window_bounds = array<i64: 8, 256>}, {pipeline_mode = #tpu.pipeline_mode<synchronous>, transform_indices = @transform_1, window_bounds = array<i64: 1, 256>}, {pipeline_mode = #tpu.pipeline_mode<synchronous>, transform_indices = @transform_2, window_bounds = array<i64: 1, 256>}, {pipeline_mode = #tpu.pipeline_mode<synchronous>, transform_indices = @transform_3, window_bounds = array<i64: 8, 256>}, {pipeline_mode = #tpu.pipeline_mode<synchronous>, transform_indices = @transform_4, window_bounds = array<i64: 8, 256>}]} {
    %c0_i32 = arith.constant 0 : i32
    %0 = arith.cmpi eq, %arg0, %c0_i32 : i32
    %1 = arith.extui %0 : i1 to i32
    %c0_i32_0 = arith.constant 0 : i32
    %2 = arith.cmpi ne, %1, %c0_i32_0 : i32
    scf.if %2 {
      %cst = arith.constant 0.000000e+00 : f32
      %22 = vector.broadcast %cst : f32 to vector<8x256xf32>
      %c0_14 = arith.constant 0 : index
      %c0_15 = arith.constant 0 : index
      %23 = vector.load %arg4[%c0_14, %c0_15] : memref<8x256xf32, #tpu.memory_space<vmem>>, vector<8x256xf32>
      tpu.vector_store %arg4[%c0_14, %c0_15], %22 {strides = array<i32>} : memref<8x256xf32, #tpu.memory_space<vmem>>, vector<8x256xf32>,
      %cst_16 = arith.constant 0.000000e+00 : f32
      %24 = vector.broadcast %cst_16 : f32 to vector<8x256xf32>
      %c0_17 = arith.constant 0 : index
      %c0_18 = arith.constant 0 : index
      %25 = vector.load %arg5[%c0_17, %c0_18] : memref<8x256xf32, #tpu.memory_space<vmem>>, vector<8x256xf32>
      tpu.vector_store %arg5[%c0_17, %c0_18], %24 {strides = array<i32>} : memref<8x256xf32, #tpu.memory_space<vmem>>, vector<8x256xf32>,
    } else {
    }
    %c0 = arith.constant 0 : index
    %c0_1 = arith.constant 0 : index
    %3 = vector.load %arg1[%c0, %c0_1] : memref<8x256xf32, #tpu.memory_space<vmem>>, vector<8x256xf32>
    %c255_i32 = arith.constant 255 : i32
    %4 = tpu.dynamic_rotate %3 by %c255_i32 dim 1 : vector<8x256xf32>, i32 -> vector<8x256xf32>
    %c240_i32 = arith.constant 240 : i32
    %5 = tpu.dynamic_rotate %3 by %c240_i32 dim 1 : vector<8x256xf32>, i32 -> vector<8x256xf32>
    %6 = arith.subf %4, %3 : vector<8x256xf32>
    %c0_2 = arith.constant 0 : index
    %c0_3 = arith.constant 0 : index
    %7 = vector.load %arg3[%c0_2, %c0_3] : memref<1x256xf32, #tpu.memory_space<vmem>>, vector<1x256xf32>
    %8 = vector.broadcast %7 : vector<1x256xf32> to vector<8x256xf32>
    %9 = arith.mulf %6, %8 : vector<8x256xf32>
    %10 = arith.subf %5, %3 : vector<8x256xf32>
    %c0_4 = arith.constant 0 : index
    %c0_5 = arith.constant 0 : index
    %11 = vector.load %arg2[%c0_4, %c0_5] : memref<1x256xf32, #tpu.memory_space<vmem>>, vector<1x256xf32>
    %12 = vector.broadcast %11 : vector<1x256xf32> to vector<8x256xf32>
    %13 = arith.mulf %10, %12 : vector<8x256xf32>
    %c0_6 = arith.constant 0 : index
    %c0_7 = arith.constant 0 : index
    %14 = vector.load %arg4[%c0_6, %c0_7] : memref<8x256xf32, #tpu.memory_space<vmem>>, vector<8x256xf32>
    %15 = arith.mulf %13, %13 : vector<8x256xf32>
    %16 = arith.addf %14, %15 : vector<8x256xf32>
    %c0_8 = arith.constant 0 : index
    %c0_9 = arith.constant 0 : index
    %17 = vector.load %arg4[%c0_8, %c0_9] : memref<8x256xf32, #tpu.memory_space<vmem>>, vector<8x256xf32>
    tpu.vector_store %arg4[%c0_8, %c0_9], %16 {strides = array<i32>} : memref<8x256xf32, #tpu.memory_space<vmem>>, vector<8x256xf32>,
    %c0_10 = arith.constant 0 : index
    %c0_11 = arith.constant 0 : index
    %18 = vector.load %arg5[%c0_10, %c0_11] : memref<8x256xf32, #tpu.memory_space<vmem>>, vector<8x256xf32>
    %19 = arith.mulf %9, %9 : vector<8x256xf32>
    %20 = arith.addf %18, %19 : vector<8x256xf32>
    %c0_12 = arith.constant 0 : index
    %c0_13 = arith.constant 0 : index
    %21 = vector.load %arg5[%c0_12, %c0_13] : memref<8x256xf32, #tpu.memory_space<vmem>>, vector<8x256xf32>
    tpu.vector_store %arg5[%c0_12, %c0_13], %20 {strides = array<i32>} : memref<8x256xf32, #tpu.memory_space<vmem>>, vector<8x256xf32>,
    return
  }
  func.func @transform_0(%arg0: i32) -> (i32, i32) {
    %c0_i32 = arith.constant 0 : i32
    %c0_i32_0 = arith.constant 0 : i32
    return %arg0, %c0_i32 : i32, i32
  }
  func.func @transform_1(%arg0: i32) -> (i32, i32) {
    %c0_i32 = arith.constant 0 : i32
    %c0_i32_0 = arith.constant 0 : i32
    %c0_i32_1 = arith.constant 0 : i32
    return %c0_i32, %c0_i32_0 : i32, i32
  }
  func.func @transform_2(%arg0: i32) -> (i32, i32) {
    %c0_i32 = arith.constant 0 : i32
    %c0_i32_0 = arith.constant 0 : i32
    %c0_i32_1 = arith.constant 0 : i32
    return %c0_i32, %c0_i32_0 : i32, i32
  }
  func.func @transform_3(%arg0: i32) -> (i32, i32) {
    %c0_i32 = arith.constant 0 : i32
    %c0_i32_0 = arith.constant 0 : i32
    %c0_i32_1 = arith.constant 0 : i32
    return %c0_i32, %c0_i32_0 : i32, i32
  }
  func.func @transform_4(%arg0: i32) -> (i32, i32) {
    %c0_i32 = arith.constant 0 : i32
    %c0_i32_0 = arith.constant 0 : i32
    %c0_i32_1 = arith.constant 0 : i32
    return %c0_i32, %c0_i32_0 : i32, i32
  }
}

</mosaic_0001>

<llo_original>
// kernel: tpu_custom_call.1
$region0: #{tpu_custom_call.1}
  #allocation0 [shape = 'u32[]', space=smem, size = 0x4, offset = 0x4, fixed_abs, tag = 'smem constant byte address 0x4 - core index']
  #allocation1 [shape = 'u32[72,128]{1,0:T(1,128)}', space=vmem, size = 0x9000, scoped, tag = 'internal scratch']
  %s0 = inlined_call_operand.hbm [shape: f32[8,256], index: 0, kind: input, shape index: {}]
  %s1 = inlined_call_operand.hbm [shape: f32[1,256], index: 1, kind: input, shape index: {}]
  %s2 = inlined_call_operand.hbm [shape: f32[1,256], index: 2, kind: input, shape index: {}]
  %s3 = inlined_call_operand.hbm [shape: f32[8,256], index: 3, kind: output, shape index: {0}]
  %s4 = inlined_call_operand.hbm [shape: f32[8,256], index: 4, kind: output, shape index: {1}]
  %5 = xla_tuple %s3, %s4
  %s6 = sld [smem:[#allocation0]]
  $region46: #{tpu_custom_call.1} parent=0
    _
  %s8 = ssub.s32 1, %s6
  %s9 = scalar_select 0, %s8, %s6
  $region1: #{tpu_custom_call.1} parent=0
    #allocation2 [shape = 'u8[8192]{0}', space=vmem, size = 0x2000, scoped, tag = 'input window, operand 0, single buffered']
    #allocation3 [shape = 's32[1]{0}', space=sflag, size = 0x4, scoped, tag = 'scoped memory for tpu_custom_call.1']
    #allocation4 [shape = 's32[1]{0}', space=sflag, size = 0x4, scoped, tag = 'scoped memory for tpu_custom_call.1']
    #allocation5 [shape = 'u8[1024]{0}', space=vmem, size = 0x400, scoped, tag = 'input window, operand 1, single buffered']
    #allocation6 [shape = 's32[1]{0}', space=sflag, size = 0x4, scoped, tag = 'scoped memory for tpu_custom_call.1']
    #allocation7 [shape = 'u8[1024]{0}', space=vmem, size = 0x400, scoped, tag = 'input window, operand 2, single buffered']
    #allocation8 [shape = 'u8[8192]{0}', space=vmem, size = 0x2000, scoped, tag = 'output window, operand 0, single buffered']
    #allocation9 [shape = 'u8[8192]{0}', space=vmem, size = 0x2000, scoped, tag = 'output window, operand 1, single buffered']
    #allocation10 [shape = 's32[1]{0}', space=sflag, size = 0x4, scoped, tag = 'scoped memory for tpu_custom_call.1']
    %10 = vsyncpa [#allocation3], 0
    %11 = vsyncpa [#allocation6], 0
    %12 = vsyncpa [#allocation4], 0
    %13 = vsyncpa [#allocation10], 0
    // Predicated region
    $region2: #{tpu_custom_call.1} parent=1 // pred_check
      _
    $region3: #{tpu_custom_call.1} parent=1 // pred_check_branch
      %15 = sbr.rel (0) target = $region5
    $region4: #{tpu_custom_call.1} parent=1 // pred_region
      %17 = vsyncadd [#allocation3], 0
      %s19 = sshll.u32 %s0, 4
      %s20 = int_to_ptr.hbm [resolvable:$true] %s19
      %s21 = sshll.u32 [#allocation2], 4
      %s22 = int_to_ptr.vmem [resolvable:$true] %s21
      %24 = dma.hbm_to_vmem [thread:$0]  %s20, 256, %s22, [#allocation3]
    $region5: #{tpu_custom_call.1} parent=1 // pred_fallthru
      _
    // Predicated region
    $region6: #{tpu_custom_call.1} parent=1 // pred_check
      _
    $region7: #{tpu_custom_call.1} parent=1 // pred_check_branch
      %26 = sbr.rel (0) target = $region9
    $region8: #{tpu_custom_call.1} parent=1 // pred_region
      %28 = vsyncadd [#allocation6], 0
      %s30 = sshll.u32 %s1, 4
      %s31 = int_to_ptr.hbm [resolvable:$true] %s30
      %s32 = sshll.u32 [#allocation5], 4
      %s33 = int_to_ptr.vmem [resolvable:$true] %s32
      %35 = dma.hbm_to_vmem [thread:$0]  %s31, 32, %s33, [#allocation6]
    $region9: #{tpu_custom_call.1} parent=1 // pred_fallthru
      _
    // Predicated region
    $region10: #{tpu_custom_call.1} parent=1 // pred_check
      _
    $region11: #{tpu_custom_call.1} parent=1 // pred_check_branch
      %37 = sbr.rel (0) target = $region13
    $region12: #{tpu_custom_call.1} parent=1 // pred_region
      %39 = vsyncadd [#allocation6], 0
      %s41 = sshll.u32 %s2, 4
      %s42 = int_to_ptr.hbm [resolvable:$true] %s41
      %s43 = sshll.u32 [#allocation7], 4
      %s44 = int_to_ptr.vmem [resolvable:$true] %s43
      %46 = dma.hbm_to_vmem [thread:$0]  %s42, 32, %s44, [#allocation6]
    $region13: #{tpu_custom_call.1} parent=1 // pred_fallthru
      _
    // Predicated region
    $region14: #{tpu_custom_call.1} parent=1 // pred_check
      _
    $region15: #{tpu_custom_call.1} parent=1 // pred_check_branch
      %48 = sbr.rel (0) target = $region17
    $region16: #{tpu_custom_call.1} parent=1 // pred_region
      %50 = dma.done [#allocation3], 256
    $region17: #{tpu_custom_call.1} parent=1 // pred_fallthru
      _
    // Predicated region
    $region18: #{tpu_custom_call.1} parent=1 // pred_check
      _
    $region19: #{tpu_custom_call.1} parent=1 // pred_check_branch
      %52 = sbr.rel (0) target = $region21
    $region20: #{tpu_custom_call.1} parent=1 // pred_region
      %54 = dma.done [#allocation6], 32
    $region21: #{tpu_custom_call.1} parent=1 // pred_fallthru
      _
    // Predicated region
    $region22: #{tpu_custom_call.1} parent=1 // pred_check
      _
    $region23: #{tpu_custom_call.1} parent=1 // pred_check_branch
      %56 = sbr.rel (0) target = $region25
    $region24: #{tpu_custom_call.1} parent=1 // pred_region
      %58 = dma.done [#allocation6], 32
    $region25: #{tpu_custom_call.1} parent=1 // pred_fallthru
      _
    %p59 = scmp.eq.s32.totalorder 0, 0
    // Predicated region
    $region26: #{tpu_custom_call.1} parent=1 // pred_check
      %p60 = pneg %p59
    $region27: #{tpu_custom_call.1} parent=1 // pred_check_branch
      %62 = sbr.rel (%p60) target = $region29
    $region28: #{tpu_custom_call.1} parent=1 // pred_region
      %63 = vst [vmem:[#allocation8] sm:$0xff] 0.0
      %64 = vst [vmem:[#allocation8 + $0x8] sm:$0xff] 0.0
      %65 = vst [vmem:[#allocation9] sm:$0xff] 0.0
      %66 = vst [vmem:[#allocation9 + $0x8] sm:$0xff] 0.0
    $region29: #{tpu_custom_call.1} parent=1 // pred_fallthru
      _
    %v67 = vld [vmem:[#allocation2] sm:$0xff]
    %v68 = vld [vmem:[#allocation2 + $0x8] sm:$0xff]
    %69 = vrot.lane.b32.xlu0 %v67, 127
    %v70 = vpop.permute.xlu0 %69
    %71 = vrot.lane.b32.xlu0 %v68, 127
    %v72 = vpop.permute.xlu0 %71
    %v73 = vlaneseq
    %v74 = vand.u32 %v73, 127
    %vm75 = vcmp.lt.s32.totalorder %v74, 127
    %v76 = vsel %vm75, %v70, %v72
    %v77 = vsel %vm75, %v72, %v70
    %78 = vrot.lane.b32.xlu0 %v67, 112
    %v79 = vpop.permute.xlu0 %78
    %80 = vrot.lane.b32.xlu0 %v68, 112
    %v81 = vpop.permute.xlu0 %80
    %vm82 = vcmp.lt.s32.totalorder %v74, 112
    %v83 = vsel %vm82, %v79, %v81
    %v84 = vsel %vm82, %v81, %v79
    %v85 = vsub.f32 %v76, %v67
    %v86 = vsub.f32 %v77, %v68
    %v87 = vld [vmem:[#allocation7] sm:$0x3]
    %v89 = vperm.slane %v87, 0
    %v90 = vperm.slane %v87, 1
    %v93 = vmul.f32 %v85, %v89
    %v94 = vmul.f32 %v86, %v90
    %v95 = vsub.f32 %v83, %v67
    %v96 = vsub.f32 %v84, %v68
    %v97 = vld [vmem:[#allocation5] sm:$0x3]
    %v99 = vperm.slane %v97, 0
    %v100 = vperm.slane %v97, 1
    %v103 = vmul.f32 %v95, %v99
    %v104 = vmul.f32 %v96, %v100
    %v105 = vld [vmem:[#allocation8] sm:$0xff]
    %v106 = vld [vmem:[#allocation8 + $0x8] sm:$0xff]
    %v107 = vmul.f32 %v103, %v103
    %v108 = vmul.f32 %v104, %v104
    %v109 = vadd.f32 %v105, %v107
    %v110 = vadd.f32 %v106, %v108
    %111 = vst [vmem:[#allocation8] sm:$0xff] %v109
    %112 = vst [vmem:[#allocation8 + $0x8] sm:$0xff] %v110
    %v113 = vld [vmem:[#allocation9] sm:$0xff]
    %v114 = vld [vmem:[#allocation9 + $0x8] sm:$0xff]
    %v115 = vmul.f32 %v93, %v93
    %v116 = vmul.f32 %v94, %v94
    %v117 = vadd.f32 %v113, %v115
    %v118 = vadd.f32 %v114, %v116
    %119 = vst [vmem:[#allocation9] sm:$0xff] %v117
    %120 = vst [vmem:[#allocation9 + $0x8] sm:$0xff] %v118
    // Predicated region
    $region30: #{tpu_custom_call.1} parent=1 // pred_check
      _
    $region31: #{tpu_custom_call.1} parent=1 // pred_check_branch
      %122 = sbr.rel (0) target = $region33
    $region32: #{tpu_custom_call.1} parent=1 // pred_region
      %124 = vsyncadd [#allocation4], 0
      %s126 = sshll.u32 [#allocation8], 4
      %s127 = int_to_ptr.vmem [resolvable:$true] %s126
      %s128 = sshll.u32 %s3, 4
      %s129 = int_to_ptr.hbm [resolvable:$true] %s128
      %131 = dma.vmem_to_hbm [thread:$0]  %s127, 256, %s129, [#allocation4]
    $region33: #{tpu_custom_call.1} parent=1 // pred_fallthru
      _
    // Predicated region
    $region34: #{tpu_custom_call.1} parent=1 // pred_check
      _
    $region35: #{tpu_custom_call.1} parent=1 // pred_check_branch
      %133 = sbr.rel (0) target = $region37
    $region36: #{tpu_custom_call.1} parent=1 // pred_region
      %135 = vsyncadd [#allocation10], 0
      %s137 = sshll.u32 [#allocation9], 4
      %s138 = int_to_ptr.vmem [resolvable:$true] %s137
      %s139 = sshll.u32 %s4, 4
      %s140 = int_to_ptr.hbm [resolvable:$true] %s139
      %142 = dma.vmem_to_hbm [thread:$0]  %s138, 256, %s140, [#allocation10]
    $region37: #{tpu_custom_call.1} parent=1 // pred_fallthru
      _
    // Predicated region
    $region38: #{tpu_custom_call.1} parent=1 // pred_check
      _
    $region39: #{tpu_custom_call.1} parent=1 // pred_check_branch
      %144 = sbr.rel (0) target = $region41
    $region40: #{tpu_custom_call.1} parent=1 // pred_region
      %146 = dma.done [#allocation4], 256
    $region41: #{tpu_custom_call.1} parent=1 // pred_fallthru
      _
    // Predicated region
    $region42: #{tpu_custom_call.1} parent=1 // pred_check
      _
    $region43: #{tpu_custom_call.1} parent=1 // pred_check_branch
      %148 = sbr.rel (0) target = $region45
    $region44: #{tpu_custom_call.1} parent=1 // pred_region
      %150 = dma.done [#allocation10], 256
    $region45: #{tpu_custom_call.1} parent=1 // pred_fallthru
      _
    %151 = vsyncpa [#allocation3], 1
    %152 = vsyncpa [#allocation6], 1
    %153 = vsyncpa [#allocation4], 1
    %154 = vsyncpa [#allocation10], 1

</llo_original>
